<compile_context>
chip_gen: v7x
topology: tpu7x:2x2x1
jax: 0.10.0
libtpu: 0.0.40
codegen_flags: <defaults>
</compile_context>

<pallas_src>
import functools

import jax
import jax.numpy as jnp
from jax.experimental import pallas as pl
from jax.experimental.pallas import tpu as pltpu


# --------------------------------------------------------------------------
# Kernels
# --------------------------------------------------------------------------
def _groupnorm_kernel(x_ref, w_ref, b_ref, o_ref, *, eps: float):
    """Whole-sample path. x_ref/o_ref: (BN, R, L); w_ref/b_ref: (R, 1)."""
    x = x_ref[...].astype(jnp.float32)
    inv_count = 1.0 / float(x_ref.shape[1] * x_ref.shape[2])
    mean = jnp.sum(x, axis=(1, 2), keepdims=True) * inv_count        # (BN,1,1)
    xc = x - mean                                                     # centered
    var = jnp.sum(xc * xc, axis=(1, 2), keepdims=True) * inv_count
    rstd = jax.lax.rsqrt(var + eps)                                   # (BN,1,1)
    w = w_ref[...].astype(jnp.float32)[None, :, :]                    # (1,R,1)
    b = b_ref[...].astype(jnp.float32)[None, :, :]
    scale = w * rstd                                                  # (BN,R,1)
    if o_ref.dtype == jnp.float32:
        o_ref[...] = xc * scale + b                                   # reuse xc
    else:
        # bf16/fp16 path: affine in the input dtype from the original tile.
        shift = b - mean * scale
        xd = x_ref[...]
        o_ref[...] = (xd * scale.astype(xd.dtype)
                      + shift.astype(xd.dtype)).astype(o_ref.dtype)


def _stats_kernel(x_ref, mean_ref, rstd_ref, *, eps: float, total_count: float):
    """Two-pass / pass 1: per-sample mean & rstd, tiled along the lane dim.

    Per-tile (mean, M2) are combined across tiles with Chan's parallel
    variance formula (numerically robust vs. sum/sum-of-squares).
    mean_ref holds the running mean; rstd_ref holds running M2 until the
    final tile, where it is converted to rsqrt(var + eps).
    """
    j = pl.program_id(1)
    x = x_ref[...].astype(jnp.float32)                                # (1,R,tL)
    tile_count = float(x_ref.shape[1] * x_ref.shape[2])
    tmean = jnp.sum(x, axis=(1, 2), keepdims=True) * (1.0 / tile_count)
    xc = x - tmean
    tm2 = jnp.sum(xc * xc, axis=(1, 2), keepdims=True)

    @pl.when(j == 0)
    def _():
        mean_ref[...] = tmean
        rstd_ref[...] = tm2

    @pl.when(j > 0)
    def _():
        n_a = j.astype(jnp.float32) * tile_count
        tot = n_a + tile_count
        mean_a = mean_ref[...]
        delta = tmean - mean_a
        mean_ref[...] = mean_a + delta * (tile_count / tot)
        rstd_ref[...] = rstd_ref[...] + tm2 + delta * delta * (n_a * tile_count / tot)

    @pl.when(j == pl.num_programs(1) - 1)
    def _():
        var = rstd_ref[...] * (1.0 / total_count)
        rstd_ref[...] = jax.lax.rsqrt(var + eps)


def _apply_kernel(x_ref, mean_ref, rstd_ref, w_ref, b_ref, o_ref):
    """Two-pass / pass 2: apply per-sample stats + per-channel affine."""
    mean = mean_ref[...]                                              # (1,1,1)
    rstd = rstd_ref[...]
    w = w_ref[...].astype(jnp.float32)[None, :, :]                    # (1,R,1)
    b = b_ref[...].astype(jnp.float32)[None, :, :]
    scale = w * rstd
    if o_ref.dtype == jnp.float32:
        o_ref[...] = (x_ref[...] - mean) * scale + b
    else:
        shift = b - mean * scale
        xd = x_ref[...]
        o_ref[...] = (xd * scale.astype(xd.dtype)
                      + shift.astype(xd.dtype)).astype(o_ref.dtype)


# --------------------------------------------------------------------------
# Sizing helpers
# --------------------------------------------------------------------------
def _vmem_capacity_bytes() -> int:
    """Physical per-core VMEM. Conservative default (v7x = 64 MiB)."""
    default = 64 << 20
    try:
        info = pltpu.get_tpu_info()
        cap = int(getattr(info, "vmem_capacity_bytes", default))
        if cap > 0:
            return cap
    except Exception:
        pass
    return default


def _divisors(n: int):
    ds = set()
    i = 1
    while i * i <= n:
        if n % i == 0:
            ds.add(i)
            ds.add(n // i)
        i += 1
    return sorted(ds)


def _ceil_to(x: int, m: int) -> int:
    return -(-x // m) * m


def _choose_row_factor(C: int, HW: int) -> int:
    """Pick r so the per-sample view (C*r, HW//r) minimizes padded vreg
    footprint (zero padding when a lane-dense 128-multiple factor exists);
    ties broken toward larger (more lane-dense) last dims."""
    best_r, best_key = 1, None
    for r in _divisors(HW):
        R, L = C * r, HW // r
        padded = _ceil_to(R, 8) * _ceil_to(L, 128)
        key = (padded, -L)
        if best_key is None or key < best_key:
            best_r, best_key = r, key
    return best_r


def _choose_l_tile(R: int, L: int, itemsize: int, vmem_budget: int,
                   target_elems: int):
    """Lane-dim tile for the two-pass path: a divisor of L whose footprint
    fits the VMEM budget, preferring 128-multiples and tiles near target."""
    per_elem = 4 * itemsize + 12
    best, best_key = None, None
    for tl in _divisors(L):
        elems = R * tl
        if elems * per_elem + (2 << 20) > vmem_budget:
            continue
        fits_target = elems <= target_elems
        key = (tl % 128 == 0, fits_target, elems if fits_target else -elems)
        if best_key is None or key > best_key:
            best, best_key = tl, key
    return best


# --------------------------------------------------------------------------
# Two-pass (sample-tiled) path
# --------------------------------------------------------------------------
def _layer_norm_two_pass(x3, w2, b2, *, eps, tile_l, per_elem, vmem_hi):
    N, R, L = x3.shape
    n_tiles = L // tile_l
    tile_elems = R * tile_l
    vmem_limit = int(min(vmem_hi, max(32 << 20, tile_elems * per_elem + (2 << 20))))
    cparams = pltpu.CompilerParams(
        dimension_semantics=("parallel", "arbitrary"),
        vmem_limit_bytes=vmem_limit)

    mean, rstd = pl.pallas_call(
        functools.partial(_stats_kernel, eps=eps, total_count=float(R * L)),
        out_shape=(jax.ShapeDtypeStruct((N, 1, 1), jnp.float32),
                   jax.ShapeDtypeStruct((N, 1, 1), jnp.float32)),
        grid_spec=pltpu.PrefetchScalarGridSpec(
            num_scalar_prefetch=0,
            grid=(N, n_tiles),
            in_specs=[pl.BlockSpec((1, R, tile_l), lambda n, j: (n, 0, j))],
            out_specs=(pl.BlockSpec((1, 1, 1), lambda n, j: (n, 0, 0)),
                       pl.BlockSpec((1, 1, 1), lambda n, j: (n, 0, 0))),
        ),
        compiler_params=cparams,
    )(x3)

    out = pl.pallas_call(
        _apply_kernel,
        out_shape=jax.ShapeDtypeStruct((N, R, L), x3.dtype),
        grid_spec=pltpu.PrefetchScalarGridSpec(
            num_scalar_prefetch=0,
            grid=(N, n_tiles),
            in_specs=[
                pl.BlockSpec((1, R, tile_l), lambda n, j: (n, 0, j)),
                pl.BlockSpec((1, 1, 1), lambda n, j: (n, 0, 0)),
                pl.BlockSpec((1, 1, 1), lambda n, j: (n, 0, 0)),
                pl.BlockSpec((R, 1), lambda n, j: (0, 0)),
                pl.BlockSpec((R, 1), lambda n, j: (0, 0)),
            ],
            out_specs=pl.BlockSpec((1, R, tile_l), lambda n, j: (n, 0, j)),
        ),
        compiler_params=pltpu.CompilerParams(
            dimension_semantics=("parallel", "parallel"),
            vmem_limit_bytes=vmem_limit),
    )(x3, mean, rstd, w2, b2)
    return out


# --------------------------------------------------------------------------
# Public wrapper
# --------------------------------------------------------------------------
def layer_norm(x: jax.Array, weight: jax.Array, bias: jax.Array,
               eps: float = 1e-5, *, force_two_pass: bool = False,
               two_pass_tile_l: int | None = None) -> jax.Array:
    """group_norm(num_groups=1) with per-channel affine over NCHW input."""
    N, C, H, W = x.shape
    HW = H * W
    r = _choose_row_factor(C, HW)
    R, L = C * r, HW // r
    x3 = x.reshape(N, R, L)
    w2 = jnp.repeat(weight, r).reshape(R, 1)
    b2 = jnp.repeat(bias, r).reshape(R, 1)

    itemsize = jnp.dtype(x.dtype).itemsize
    sample_elems = R * L

    vmem_cap = _vmem_capacity_bytes()
    vmem_budget = min(int(vmem_cap * 0.85), 96 << 20)     # working budget
    vmem_hi = min(int(vmem_cap * 0.90), 100 << 20)        # hard ceiling
    # Per-element VMEM footprint: in+out double-buffered + ~3 f32 tile temps.
    per_elem = 4 * itemsize + 12
    max_block_elems = max(1, (vmem_budget - (2 << 20)) // per_elem)
    # ~4-8 MiB of HBM traffic per grid step, derived from the VMEM budget.
    target_block_elems = max(1, min(max_block_elems, (8 << 20) // itemsize))

    needs_two_pass = force_two_pass or sample_elems > max_block_elems
    if needs_two_pass:
        tl = two_pass_tile_l
        if tl is None or tl <= 0 or L % tl != 0:
            tl = _choose_l_tile(R, L, itemsize, vmem_budget, target_block_elems)
        if tl is not None:
            out3 = _layer_norm_two_pass(x3, w2, b2, eps=eps, tile_l=tl,
                                        per_elem=per_elem, vmem_hi=vmem_hi)
            return out3.reshape(N, C, H, W)
        # TODO(synk): samples whose (R, L) view has no VMEM-sized lane-dim
        # divisor would need an additional sublane(R)-tiled two-pass variant;
        # fall through to a best-effort whole-sample call.

    desired_steps = min(N, 4)   # >= 2 grid steps per v7x TensorCore when N allows
    block_n = int(max(1, min(target_block_elems // sample_elems,
                             N // desired_steps)))
    block_n = min(block_n, N)
    grid = (pl.cdiv(N, block_n),)   # block_n need not divide N (masked tail)
    vmem_limit = int(min(vmem_hi, max(32 << 20,
                                      block_n * sample_elems * per_elem + (2 << 20))))

    out = pl.pallas_call(
        functools.partial(_groupnorm_kernel, eps=eps),
        out_shape=jax.ShapeDtypeStruct((N, R, L), x.dtype),
        grid_spec=pltpu.PrefetchScalarGridSpec(
            num_scalar_prefetch=0,
            grid=grid,
            in_specs=[
                pl.BlockSpec((block_n, R, L), lambda i: (i, 0, 0)),
                pl.BlockSpec((R, 1), lambda i: (0, 0)),
                pl.BlockSpec((R, 1), lambda i: (0, 0)),
            ],
            out_specs=pl.BlockSpec((block_n, R, L), lambda i: (i, 0, 0)),
        ),
        compiler_params=pltpu.CompilerParams(
            dimension_semantics=("parallel",),
            vmem_limit_bytes=vmem_limit,
        ),
    )(x3, w2, b2)
    return out.reshape(N, C, H, W)


# --------------------------------------------------------------------------
# Reference & self-test
# --------------------------------------------------------------------------
def _reference(x, weight, bias, eps=1e-5):
    N, C, H, W = x.shape
    xf = x.reshape(N, -1).astype(jnp.float32)
    mean = xf.mean(axis=1, keepdims=True)
    var = ((xf - mean) ** 2).mean(axis=1, keepdims=True)
    xn = ((xf - mean) / jnp.sqrt(var + eps)).reshape(N, C, H, W)
    return (xn * weight.reshape(1, C, 1, 1).astype(jnp.float32)
            + bias.reshape(1, C, 1, 1).astype(jnp.float32)).astype(x.dtype)


if __name__ == "__main__":
    key = jax.random.PRNGKey(0)
    kx, kw, kb, kx2, kx3 = jax.random.split(key, 5)

    # 1) Primary check: module-default parameters (ones / zeros), f32 input.
    N, C, H, W = 2, 4, 16, 16
    x = jax.random.normal(kx, (N, C, H, W), dtype=jnp.float32)
    weight = jnp.ones((C,), dtype=jnp.float32)
    bias = jnp.zeros((C,), dtype=jnp.float32)
    y = layer_norm(x, weight, bias, eps=1e-5)
    jax.block_until_ready(y)
    assert y.shape == x.shape
    assert jnp.allclose(y, _reference(x, weight, bias), atol=1e-4, rtol=1e-4)

    # 2) Non-trivial affine, offset inputs, awkward 14x14 spatial (fallback
    #    layout with no 128-multiple lane factor).
    x2 = jax.random.normal(kx2, (3, 4, 14, 14), dtype=jnp.float32) * 3.0 + 1.5
    w_r = jax.random.normal(kw, (4,), dtype=jnp.float32)
    b_r = jax.random.normal(kb, (4,), dtype=jnp.float32)
    y2 = layer_norm(x2, w_r, b_r, eps=1e-5)
    jax.block_until_ready(y2)
    assert jnp.allclose(y2, _reference(x2, w_r, b_r), atol=1e-4, rtol=1e-4)

    # 3) Two-pass (sample-tiled) path, forced at a small shape to validate
    #    the Chan-combined stats + affine sweep end to end.
    x3 = jax.random.normal(kx3, (2, 4, 16, 64), dtype=jnp.float32) * 2.0 - 0.7
    y3 = layer_norm(x3, w_r, b_r, eps=1e-5,
                    force_two_pass=True, two_pass_tile_l=128)
    jax.block_until_ready(y3)
    assert jnp.allclose(y3, _reference(x3, w_r, b_r), atol=1e-4, rtol=1e-4)

    # 4) bf16 I/O (affine applied in bf16, stats in f32).
    xb = x.astype(jnp.bfloat16)
    yb = layer_norm(xb, weight, bias, eps=1e-5)
    jax.block_until_ready(yb)
    yb_ref = _reference(xb, weight, bias)
    assert jnp.allclose(yb.astype(jnp.float32), yb_ref.astype(jnp.float32),
                        atol=5e-2, rtol=5e-2)

    print("KERNEL_OK")
</pallas_src>

<mosaic_0001>
module attributes {stable_mosaic.version = 11 : i64} {
  func.func @_groupnorm_kernel(%arg0: i32, %arg1: memref<1x8x128xf32, #tpu.memory_space<vmem>>, %arg2: memref<8x1xf32, #tpu.memory_space<vmem>>, %arg3: memref<8x1xf32, #tpu.memory_space<vmem>>, %arg4: memref<1x8x128xf32, #tpu.memory_space<vmem>>) attributes {dimension_semantics = [#tpu.dimension_semantics<parallel>], iteration_bounds = array<i64: 2>, scalar_prefetch = 0 : i64, scratch_operands = 0 : i64, tpu.core_type = #tpu.core_type<tc>, window_params = [{transform_indices = @transform_0, window_bounds = array<i64: 1, 8, 128>}, {pipeline_mode = #tpu.pipeline_mode<synchronous>, transform_indices = @transform_1, window_bounds = array<i64: 8, 1>}, {pipeline_mode = #tpu.pipeline_mode<synchronous>, transform_indices = @transform_2, window_bounds = array<i64: 8, 1>}, {transform_indices = @transform_3, window_bounds = array<i64: 1, 8, 128>}]} {
    %c0 = arith.constant 0 : index
    %c0_0 = arith.constant 0 : index
    %c0_1 = arith.constant 0 : index
    %0 = vector.load %arg1[%c0, %c0_0, %c0_1] : memref<1x8x128xf32, #tpu.memory_space<vmem>>, vector<1x8x128xf32>
    %cst = arith.constant dense<0.000000e+00> : vector<1xf32>
    %1 = vector.multi_reduction <add>, %0, %cst [1, 2] : vector<1x8x128xf32> to vector<1xf32>
    %2 = vector.shape_cast %1 : vector<1xf32> to vector<1x1x1xf32>
    %cst_2 = arith.constant 9.765625E-4 : f32
    %3 = vector.broadcast %cst_2 : f32 to vector<1x1x1xf32>
    %4 = arith.mulf %2, %3 : vector<1x1x1xf32>
    %5 = vector.broadcast %4 : vector<1x1x1xf32> to vector<1x8x128xf32>
    %6 = arith.subf %0, %5 : vector<1x8x128xf32>
    %7 = arith.mulf %6, %6 : vector<1x8x128xf32>
    %cst_3 = arith.constant dense<0.000000e+00> : vector<1xf32>
    %8 = vector.multi_reduction <add>, %7, %cst_3 [1, 2] : vector<1x8x128xf32> to vector<1xf32>
    %9 = vector.shape_cast %8 : vector<1xf32> to vector<1x1x1xf32>
    %cst_4 = arith.constant 9.765625E-4 : f32
    %10 = vector.broadcast %cst_4 : f32 to vector<1x1x1xf32>
    %11 = arith.mulf %9, %10 : vector<1x1x1xf32>
    %cst_5 = arith.constant 9.99999974E-6 : f32
    %12 = vector.broadcast %cst_5 : f32 to vector<1x1x1xf32>
    %13 = arith.addf %11, %12 : vector<1x1x1xf32>
    %14 = math.rsqrt %13 : vector<1x1x1xf32>
    %c0_6 = arith.constant 0 : index
    %c0_7 = arith.constant 0 : index
    %15 = vector.load %arg2[%c0_6, %c0_7] : memref<8x1xf32, #tpu.memory_space<vmem>>, vector<8x1xf32>
    %16 = vector.shape_cast %15 : vector<8x1xf32> to vector<1x8x1xf32>
    %c0_8 = arith.constant 0 : index
    %c0_9 = arith.constant 0 : index
    %17 = vector.load %arg3[%c0_8, %c0_9] : memref<8x1xf32, #tpu.memory_space<vmem>>, vector<8x1xf32>
    %18 = vector.shape_cast %17 : vector<8x1xf32> to vector<1x8x1xf32>
    %19 = vector.broadcast %14 : vector<1x1x1xf32> to vector<1x8x1xf32>
    %20 = arith.mulf %16, %19 : vector<1x8x1xf32>
    %21 = vector.broadcast %20 : vector<1x8x1xf32> to vector<1x8x128xf32>
    %22 = arith.mulf %6, %21 : vector<1x8x128xf32>
    %23 = vector.broadcast %18 : vector<1x8x1xf32> to vector<1x8x128xf32>
    %24 = arith.addf %22, %23 : vector<1x8x128xf32>
    %c0_10 = arith.constant 0 : index
    %c0_11 = arith.constant 0 : index
    %c0_12 = arith.constant 0 : index
    %25 = vector.load %arg4[%c0_10, %c0_11, %c0_12] : memref<1x8x128xf32, #tpu.memory_space<vmem>>, vector<1x8x128xf32>
    tpu.vector_store %arg4[%c0_10, %c0_11, %c0_12], %24 {strides = array<i32>} : memref<1x8x128xf32, #tpu.memory_space<vmem>>, vector<1x8x128xf32>,
    return
  }
  func.func @transform_0(%arg0: i32) -> (i32, i32, i32) {
    %c0_i32 = arith.constant 0 : i32
    %c0_i32_0 = arith.constant 0 : i32
    %c0_i32_1 = arith.constant 0 : i32
    return %arg0, %c0_i32, %c0_i32_0 : i32, i32, i32
  }
  func.func @transform_1(%arg0: i32) -> (i32, i32) {
    %c0_i32 = arith.constant 0 : i32
    %c0_i32_0 = arith.constant 0 : i32
    %c0_i32_1 = arith.constant 0 : i32
    return %c0_i32, %c0_i32_0 : i32, i32
  }
  func.func @transform_2(%arg0: i32) -> (i32, i32) {
    %c0_i32 = arith.constant 0 : i32
    %c0_i32_0 = arith.constant 0 : i32
    %c0_i32_1 = arith.constant 0 : i32
    return %c0_i32, %c0_i32_0 : i32, i32
  }
  func.func @transform_3(%arg0: i32) -> (i32, i32, i32) {
    %c0_i32 = arith.constant 0 : i32
    %c0_i32_0 = arith.constant 0 : i32
    %c0_i32_1 = arith.constant 0 : i32
    return %arg0, %c0_i32, %c0_i32_0 : i32, i32, i32
  }
}

</mosaic_0001>

<llo_original>
// kernel: tpu_custom_call.1
$region0: #{tpu_custom_call.1}
  #allocation0 [shape = 'u32[]', space=smem, size = 0x4, offset = 0x4, fixed_abs, tag = 'smem constant byte address 0x4 - core index']
  #allocation1 [shape = 'u32[144,128]{1,0:T(1,128)}', space=vmem, size = 0x12000, scoped, tag = 'internal scratch']
  %s0 = inlined_call_operand.vmem [shape: f32[2,8,128], index: 0, kind: input, shape index: {}]
  %s1 = inlined_call_operand.vmem [shape: f32[8,1], index: 1, kind: input, shape index: {}]
  %s2 = inlined_call_operand.vmem [shape: f32[8,1], index: 2, kind: input, shape index: {}]
  %s3 = inlined_call_operand.hbm [shape: f32[2,8,128], index: 3, kind: output, shape index: {}]
  %s4 = sld [smem:[#allocation0]]
  $region45: #{tpu_custom_call.1} parent=0
    _
  %s6 = ssub.s32 1, %s4
  %s7 = scalar_select 0, %s6, %s4
  $region1: #{tpu_custom_call.1} parent=0
    #allocation2 [shape = 'u8[8192]{0}', space=vmem, size = 0x2000, scoped, tag = 'output window, operand 0']
    #allocation3 [shape = 's32[2]{0}', space=sflag, size = 0x8, scoped, tag = 'scoped memory for tpu_custom_call.1']
    %8 = vsyncpa [#allocation3], 0
    %s9 = scalar_lea.sflag [#allocation3], 1
    %10 = vsyncpa %s9, 0
    loop: start=0, step=1, limit=4
    $region2: #{tpu_custom_call.1} parent=1 // loop_pre_header
      _
    $region3: #{tpu_custom_call.1} parent=1 // loop_header
      %s12 = sphi 0, %s16
      %p13 = scmp.ge.s32.totalorder %s12, 4
      %s22 = sphi 0, %s24
      %s25 = sphi 0, %s22
      %s26 = sphi 0, %s25
      %s42 = sphi 0, %s26
      %s46 = sphi 0, %s46
      %s48 = sphi 0, %s46
      %s49 = sphi 0, %s48
      %s63 = sphi 0, %s49
      %s67 = sphi 0, %s67
      %s69 = sphi 0, %s67
      %s70 = sphi 0, %s69
      %s84 = sphi 0, %s70
      %s90 = sphi 0, %s92
      %s93 = sphi 0, %s90
      %s94 = sphi 0, %s93
      %s110 = sphi 0, %s94
    $region4: #{tpu_custom_call.1} parent=1 // loop_header_branch
      %15 = sbr.rel (%p13) target = $region8
    $region5: #{tpu_custom_call.1} parent=1 // loop_body
      %s17 = ssub.s32 %s12, 1
      %s18 = ssub.s32 %s12, 2
      %s19 = sadd.s32 %s12, 1
      %s20 = ssub.s32 %s12, %s19
      %p21 = scmp.eq.s32.totalorder %s20, 0
      %s23 = sadd.s32 %s22, 1
      %s24 = scalar_select %p21, %s22, %s23
      %p27 = pneg %p21
      %p28 = scmp.eq.s32.totalorder %s12, 1
      %p29 = por %p27, %p28
      %p30 = scmp.ne.s32.totalorder %s22, %s25
      %p31 = scmp.eq.s32.totalorder %s12, 0
      %p32 = por %p30, %p31
      %p33 = scmp.ne.s32.totalorder %s22, %s25
      %p34 = scmp.eq.s32.totalorder %s17, 1
      %p35 = por %p33, %p34
      %p36 = scmp.ne.s32.totalorder %s25, %s26
      %p37 = scmp.eq.s32.totalorder %s17, 0
      %p38 = por %p36, %p37
      %p39 = scmp.ne.s32.totalorder %s25, %s26
      %p40 = scmp.eq.s32.totalorder %s18, 1
      %p41 = por %p39, %p40
      %p43 = scmp.ne.s32.totalorder %s26, %s42
      %p44 = scmp.eq.s32.totalorder %s18, 0
      %p45 = por %p43, %p44
      %s47 = sadd.s32 %s46, 1
      %p50 = scmp.eq.s32.totalorder %s12, 1
      %p51 = scmp.ne.s32.totalorder %s46, %s48
      %p52 = scmp.eq.s32.totalorder %s12, 0
      %p53 = por %p51, %p52
      %p54 = scmp.ne.s32.totalorder %s46, %s48
      %p55 = scmp.eq.s32.totalorder %s17, 1
      %p56 = por %p54, %p55
      %p57 = scmp.ne.s32.totalorder %s48, %s49
      %p58 = scmp.eq.s32.totalorder %s17, 0
      %p59 = por %p57, %p58
      %p60 = scmp.ne.s32.totalorder %s48, %s49
      %p61 = scmp.eq.s32.totalorder %s18, 1
      %p62 = por %p60, %p61
      %p64 = scmp.ne.s32.totalorder %s49, %s63
      %p65 = scmp.eq.s32.totalorder %s18, 0
      %p66 = por %p64, %p65
      %s68 = sadd.s32 %s67, 1
      %p71 = scmp.eq.s32.totalorder %s12, 1
      %p72 = scmp.ne.s32.totalorder %s67, %s69
      %p73 = scmp.eq.s32.totalorder %s12, 0
      %p74 = por %p72, %p73
      %p75 = scmp.ne.s32.totalorder %s67, %s69
      %p76 = scmp.eq.s32.totalorder %s17, 1
      %p77 = por %p75, %p76
      %p78 = scmp.ne.s32.totalorder %s69, %s70
      %p79 = scmp.eq.s32.totalorder %s17, 0
      %p80 = por %p78, %p79
      %p81 = scmp.ne.s32.totalorder %s69, %s70
      %p82 = scmp.eq.s32.totalorder %s18, 1
      %p83 = por %p81, %p82
      %p85 = scmp.ne.s32.totalorder %s70, %s84
      %p86 = scmp.eq.s32.totalorder %s18, 0
      %p87 = por %p85, %p86
      %s88 = ssub.s32 %s12, %s19
      %p89 = scmp.eq.s32.totalorder %s88, 0
      %s91 = sadd.s32 %s90, 1
      %s92 = scalar_select %p89, %s90, %s91
      %p95 = pneg %p89
      %p96 = scmp.eq.s32.totalorder %s12, 1
      %p97 = por %p95, %p96
      %p98 = scmp.ne.s32.totalorder %s90, %s93
      %p99 = scmp.eq.s32.totalorder %s12, 0
      %p100 = por %p98, %p99
      %p101 = scmp.ne.s32.totalorder %s90, %s93
      %p102 = scmp.eq.s32.totalorder %s17, 1
      %p103 = por %p101, %p102
      %p104 = scmp.ne.s32.totalorder %s93, %s94
      %p105 = scmp.eq.s32.totalorder %s17, 0
      %p106 = por %p104, %p105
      %p107 = scmp.ne.s32.totalorder %s93, %s94
      %p108 = scmp.eq.s32.totalorder %s18, 1
      %p109 = por %p107, %p108
      %p111 = scmp.ne.s32.totalorder %s94, %s110
      %p112 = scmp.eq.s32.totalorder %s18, 0
      %p113 = por %p111, %p112
      %p114 = scmp.le.s32.totalorder 1, %s12
      %p115 = scmp.lt.s32.totalorder %s12, 3
      %p116 = pnand %p114, %p115
      %p117 = pneg %p116
      // Predicated region
      $region9: #{tpu_custom_call.1} parent=5 // pred_check
        _
      $region10: #{tpu_custom_call.1} parent=5 // pred_check_branch
        %119 = sbr.rel (%p116) target = $region12
      $region11: #{tpu_custom_call.1} parent=5 // pred_region
        %s120 = ssub.s32 %s12, 1
        // Predicated region
        $region13: #{tpu_custom_call.1} parent=11 // pred_check
          %p121 = pneg %p59
        $region14: #{tpu_custom_call.1} parent=11 // pred_check_branch
          %123 = sbr.rel (%p121) target = $region16
        $region15: #{tpu_custom_call.1} parent=11 // pred_region
          _
        $region16: #{tpu_custom_call.1} parent=11 // pred_fallthru
          _
        // Predicated region
        $region17: #{tpu_custom_call.1} parent=11 // pred_check
          %p124 = pneg %p80
        $region18: #{tpu_custom_call.1} parent=11 // pred_check_branch
          %126 = sbr.rel (%p124) target = $region20
        $region19: #{tpu_custom_call.1} parent=11 // pred_region
          _
        $region20: #{tpu_custom_call.1} parent=11 // pred_fallthru
          _
      $region12: #{tpu_custom_call.1} parent=5 // pred_fallthru
        _
      %p127 = scmp.lt.s32.totalorder %s12, 2
      // Predicated region
      $region21: #{tpu_custom_call.1} parent=5 // pred_check
        %p128 = pneg %p127
      $region22: #{tpu_custom_call.1} parent=5 // pred_check_branch
        %130 = sbr.rel (%p128) target = $region24
      $region23: #{tpu_custom_call.1} parent=5 // pred_region
        // Predicated region
        $region25: #{tpu_custom_call.1} parent=23 // pred_check
          %p131 = pneg %p32
        $region26: #{tpu_custom_call.1} parent=23 // pred_check_branch
          %133 = sbr.rel (%p131) target = $region28
        $region27: #{tpu_custom_call.1} parent=23 // pred_region
          %p134 = scmp.lt.s32.totalorder %s12, 1
          %s135 = scalar_select %p134, %s12, 1
          %s136 = smul.addr %s135, 8
          %s137 = scalar_lea.vmem %s0, %s136
        $region28: #{tpu_custom_call.1} parent=23 // pred_fallthru
          _
      $region24: #{tpu_custom_call.1} parent=5 // pred_fallthru
        _
      %p138 = scmp.le.s32.totalorder 1, %s12
      %p139 = scmp.lt.s32.totalorder %s12, 3
      %p140 = pnand %p138, %p139
      %p141 = pneg %p140
      // Predicated region
      $region29: #{tpu_custom_call.1} parent=5 // pred_check
        _
      $region30: #{tpu_custom_call.1} parent=5 // pred_check_branch
        %143 = sbr.rel (%p140) target = $region32
      $region31: #{tpu_custom_call.1} parent=5 // pred_region
        %s144 = ssub.s32 %s12, 1
        %p145 = scmp.lt.s32.totalorder %s17, 1
        %s146 = scalar_select %p145, %s17, 1
        %s147 = smul.addr %s146, 8
        %s148 = scalar_lea.vmem %s0, %s147
        %p149 = pneg %p38
        %p150 = pneg %p35
        %p151 = pneg %p59
        %p152 = pneg %p56
        %p153 = pneg %p80
        %p154 = pneg %p77
        %p155 = pneg %p106
        %p156 = pneg %p103
        %s157 = sand.u32 %s93, 1
        %s158 = scalar_lea.sflag [#allocation3], %s157
        %s159 = sand.u32 %s93, 1
        %s160 = smul.addr %s159, 8
        %s161 = scalar_lea.vmem [#allocation2], %s160
        %p162 = scmp.lt.s32.totalorder %s17, 1
        %s163 = scalar_select %p162, %s17, 1
        %s164 = smul.addr %s163, 8
        %s165 = scalar_lea.vmem %s0, %s164
        %v166 = vld [vmem:[%s165] sm:$0xff]
        %167 = vadd.xlane.f32.xlu0 %v166
        %v168 = vpop.xlane.xlu0 %167
        %v169 = vrot.slane %v168, 4
        %v170 = vadd.f32 %v168, %v169
        %v171 = vrot.slane %v170, 2
        %v172 = vadd.f32 %v170, %v171
        %v173 = vrot.slane %v172, 1
        %v174 = vadd.f32 %v172, %v173
        %v175 = vmul.f32 %v174, 0.0009765625
        %v176 = vsub.f32 %v166, %v175
        %v177 = vmul.f32 %v176, %v176
        %178 = vadd.xlane.f32.xlu0 %v177
        %v179 = vpop.xlane.xlu0 %178
        %v180 = vrot.slane %v179, 4
        %v181 = vadd.f32 %v179, %v180
        %v182 = vrot.slane %v181, 2
        %v183 = vadd.f32 %v181, %v182
        %v184 = vrot.slane %v183, 1
        %v185 = vadd.f32 %v183, %v184
        %v186 = vmul.f32 %v185, 0.0009765625
        %v187 = vadd.f32 %v186, 1e-05
        %v188 = vrsqrt.pop %v187
        %v189 = vld [vmem:[%s1] sm:$0xff]
        %v190 = vld [vmem:[%s2] sm:$0xff]
        %v191 = vmul.f32 %v189, %v188
        %193 = vset.pattern.permute.xlu0 0
        %194 = vperm.xlu0 %193, %v191
        %v195 = vpop.permute.xlu0 %194
        %v197 = vmul.f32 %v176, %v195
        %199 = vset.pattern.permute.xlu0 0
        %200 = vperm.xlu0 %199, %v190
        %v201 = vpop.permute.xlu0 %200
        %v203 = vadd.f32 %v197, %v201
        %204 = vst [vmem:[%s161] sm:$0xff] %v203
        %s205 = sand.u32 %s93, 1
        %s206 = scalar_lea.sflag [#allocation3], %s205
        %s207 = sand.u32 %s93, 1
        %s208 = smul.addr %s207, 8
        %s209 = scalar_lea.vmem [#allocation2], %s208
        // Predicated region
        $region33: #{tpu_custom_call.1} parent=31 // pred_check
          %p210 = pneg %p103
        $region34: #{tpu_custom_call.1} parent=31 // pred_check_branch
          %212 = sbr.rel (%p210) target = $region36
        $region35: #{tpu_custom_call.1} parent=31 // pred_region
          %s214 = ssub.s32 128, 128
          %215 = vsyncadd %s206, %s214
          %s216 = smul.addr %s17, 128
          %s217 = scalar_lea.hbm %s3, %s216
          %s219 = sshll.u32 %s209, 4
          %s220 = int_to_ptr.vmem [resolvable:$true] %s219
          %222 = dma.vmem_to_hbm [thread:$0]  %s220, 128, %s217, %s206
        $region36: #{tpu_custom_call.1} parent=31 // pred_fallthru
          _
      $region32: #{tpu_custom_call.1} parent=5 // pred_fallthru
        _
      %p223 = scmp.le.s32.totalorder 2, %s12
      // Predicated region
      $region37: #{tpu_custom_call.1} parent=5 // pred_check
        %p224 = pneg %p223
      $region38: #{tpu_custom_call.1} parent=5 // pred_check_branch
        %226 = sbr.rel (%p224) target = $region40
      $region39: #{tpu_custom_call.1} parent=5 // pred_region
        %s227 = ssub.s32 %s12, 2
        // Predicated region
        $region41: #{tpu_custom_call.1} parent=39 // pred_check
          %p228 = pneg %p109
        $region42: #{tpu_custom_call.1} parent=39 // pred_check_branch
          %230 = sbr.rel (%p228) target = $region44
        $region43: #{tpu_custom_call.1} parent=39 // pred_region
          %s231 = sand.u32 %s94, 1
          %s232 = scalar_lea.sflag [#allocation3], %s231
          %s233 = sand.u32 %s94, 1
          %s234 = smul.addr %s233, 8
          %s235 = scalar_lea.vmem [#allocation2], %s234
          %236 = dma.done %s232, 128
        $region44: #{tpu_custom_call.1} parent=39 // pred_fallthru
          _
      $region40: #{tpu_custom_call.1} parent=5 // pred_fallthru
        _
    $region6: #{tpu_custom_call.1} parent=1 // loop_footer
      %s16 = sadd.s32 1, %s12
    $region7: #{tpu_custom_call.1} parent=1 // loop_footer_branch
      %11 = sbr.rel target = $region3
    $region8: #{tpu_custom_call.1} parent=1 // loop_exit
      _
    %237 = vsyncpa [#allocation3], 1
    %s238 = scalar_lea.sflag [#allocation3], 1
    %239 = vsyncpa %s238, 1

</llo_original>
